<compile_context>
chip_gen: v7x
topology: tpu7x:2x2x1
jax: 0.10.0
libtpu: 0.0.40
codegen_flags: <defaults>
</compile_context>

<pallas_src>
import functools

import jax
import jax.numpy as jnp
from jax import lax
from jax.experimental import pallas as pl
from jax.experimental.pallas import tpu as pltpu


def _round_up(x, m):
    return ((x + m - 1) // m) * m


def _supcon_kernel(lab_row_ref, lab_col_ref, feat_ref, out_ref, *,
                   temperature, base_temperature, n_valid, tm):
    i = pl.program_id(0)
    row_base = pl.multiple_of(i * tm, tm)

    # Anchors come straight out of the resident contrast block (no second HBM
    # stream).  sqrt(1/T) was folded into the features symmetrically in the
    # wrapper, so the bf16 MXU product below is already adc / T (f32 accum).
    feat = feat_ref[...]                              # (Np, Dp) bf16, resident
    anc = feat_ref[pl.ds(row_base, tm), :]            # (TM, Dp) bf16

    # NT contraction on the last dims (same pattern as the production
    # flash-attention q·kᵀ einsum — Mosaic feeds the MXU without a per-step
    # transpose of the resident operand).
    adc = lax.dot_general(anc, feat, (((1,), (1,)), ((), ())),
                          preferred_element_type=jnp.float32)   # (TM, Np) f32

    tm_, np_ = adc.shape
    row_ids = lax.broadcasted_iota(jnp.int32, (tm_, 1), 0) + row_base   # (TM,1)
    col_ids = lax.broadcasted_iota(jnp.int32, (1, np_), 1)              # (1,Np)
    col_valid = col_ids < n_valid                                       # (1,Np)
    not_diag = row_ids != col_ids                                       # (TM,Np)

    # Fold column validity into the pre-exp mask: padded columns become -1e30,
    # exp() makes them exactly 0, so no separate validity multiply is needed.
    masked = jnp.where(col_valid, adc, -1e30)
    row_max = jnp.max(masked, axis=1, keepdims=True)      # numerically stable
    logits = masked - row_max
    e = jnp.exp(logits)                                   # padded cols -> 0

    ndf = not_diag.astype(jnp.float32)
    total_e = jnp.sum(e, axis=1, keepdims=True)           # incl. diagonal
    denom = jnp.sum(e * ndf, axis=1, keepdims=True)       # excl. diagonal
    log_denom = jnp.log(denom)

    # positives: same label, not self.  Padded labels are a NaN sentinel
    # (NaN == x is always False), so no extra `& valid` pass is needed.
    label_eq = lab_row_ref[...] == lab_col_ref[...]       # (TM,1)==(1,Np) -> (TM,Np)
    pos = jnp.logical_and(label_eq, not_diag).astype(jnp.float32)

    pos_cnt = jnp.sum(pos, axis=1, keepdims=True)
    pos_e = jnp.sum(pos * e, axis=1, keepdims=True)
    pos_logit_sum = jnp.sum(pos * logits, axis=1, keepdims=True)

    inv_pc = 1.0 / (pos_cnt + 1.0)
    mean_log_prob_pos = (pos_logit_sum - pos_cnt * log_denom) * inv_pc
    pos_sim = pos_e * inv_pc

    # negatives (mask==0, diagonal included) derived algebraically
    neg_e = total_e - pos_e
    neg_cnt = jnp.float32(n_valid) - pos_cnt
    neg_sim = neg_e / (neg_cnt + 1.0)

    loss_col = (-(temperature / base_temperature)) * mean_log_prob_pos  # (TM,1)

    # Per-tile partial reduction over valid anchor rows -> one lane-dense
    # (8, 128) output tile; lanes 0/1/2 hold Σloss / Σpos_sim / Σneg_sim.
    row_valid = (row_ids < n_valid).astype(jnp.float32)   # (TM,1)
    loss_sum = jnp.sum(loss_col * row_valid, keepdims=True)   # (1,1)
    pos_sum = jnp.sum(pos_sim * row_valid, keepdims=True)
    neg_sum = jnp.sum(neg_sim * row_valid, keepdims=True)

    lane = lax.broadcasted_iota(jnp.int32, (8, 128), 1)
    sub = lax.broadcasted_iota(jnp.int32, (8, 128), 0)
    vals = (jnp.where(lane == 0, loss_sum, 0.0)
            + jnp.where(lane == 1, pos_sum, 0.0)
            + jnp.where(lane == 2, neg_sum, 0.0))
    out_ref[...] = jnp.where(sub == 0, vals, 0.0)


def supcon_loss_v2(features, labels=None, *, temperature=0.07,
                   base_temperature=0.07):
    """Returns (loss, avg_positive_similarity, avg_negative_similarity)."""
    if features.ndim < 3:
        raise ValueError("`features` needs to be [bsz, n_views, ...]")
    if features.ndim > 3:
        features = features.reshape(features.shape[0], features.shape[1], -1)
    bsz, n_views, dim = features.shape
    N = bsz * n_views

    # contrast_feature = torch.cat(torch.unbind(features, dim=1), dim=0)  (view-major)
    contrast = jnp.transpose(features, (1, 0, 2)).reshape(N, dim).astype(jnp.float32)
    # Symmetric sqrt(1/T) scaling: (s f)(s f)^T == (f f^T)/T with s = sqrt(1/T),
    # so the kernel needs no in-kernel temperature scaling and each bf16 MXU
    # operand carries only one rounding step.
    scale = (1.0 / float(temperature)) ** 0.5
    contrast_scaled = (contrast * scale).astype(jnp.bfloat16)

    # view-major label vector; labels=None == per-sample identity (eye mask)
    if labels is None:
        lab = jnp.arange(bsz, dtype=jnp.float32)
    else:
        lab = labels.reshape(-1).astype(jnp.float32)
    lab_vec = jnp.tile(lab, n_views)                     # length N, view-major

    # Pad to TPU-friendly tiles.  Zero feature padding is inert, padded contrast
    # columns are masked in-kernel, padded labels are NaN (never equal).
    D_pad = _round_up(max(dim, 1), 128)
    if N <= 128:
        TM = _round_up(N, 8)
        N_pad = TM
    else:
        TM = 128
        N_pad = _round_up(N, TM)
    n_tiles = N_pad // TM

    feat_p = jnp.zeros((N_pad, D_pad), jnp.bfloat16).at[:N, :dim].set(contrast_scaled)
    lab_p = jnp.full((N_pad,), jnp.nan, jnp.float32).at[:N].set(lab_vec)
    lab_row = lab_p.reshape(N_pad, 1)
    lab_col = lab_p.reshape(1, N_pad)

    kernel = functools.partial(
        _supcon_kernel,
        temperature=float(temperature),
        base_temperature=float(base_temperature),
        n_valid=int(N), tm=int(TM))

    # Explicit scoped-VMEM budget: single-buffered bf16 resident contrast +
    # labels + a generous allowance for the (TM, N_pad) f32 temporaries/spills,
    # x2 headroom, clamped to [32 MiB, 64 MiB] (>= default scoped limit on all
    # generations, <= v7x per-TC physical VMEM).
    resident_b = N_pad * D_pad * 2                 # bf16 contrast, 1 buffer
    labels_b = N_pad * 4 * 3 + TM * 4 * 2
    work_b = 12 * TM * N_pad * 4                   # elementwise temporaries
    out_b = 2 * 8 * 128 * 4
    vmem_limit = int(min(64 * 1024 * 1024,
                         max(32 * 1024 * 1024,
                             2 * (resident_b + labels_b + work_b + out_b))))

    grid_spec = pltpu.PrefetchScalarGridSpec(
        num_scalar_prefetch=0,
        grid=(n_tiles,),
        in_specs=[
            # per-tile anchor labels (tiny streamed block)
            pl.BlockSpec((TM, 1), lambda i: (i, 0)),
            # resident blocks: constant index -> fetched once, single-buffered
            pl.BlockSpec((1, N_pad), lambda i: (0, 0),
                         pipeline_mode=pl.Buffered(1)),
            pl.BlockSpec((N_pad, D_pad), lambda i: (0, 0),
                         pipeline_mode=pl.Buffered(1)),
        ],
        out_specs=pl.BlockSpec((8, 128), lambda i: (i, 0)),
    )

    partials = pl.pallas_call(
        kernel,
        out_shape=jax.ShapeDtypeStruct((n_tiles * 8, 128), jnp.float32),
        grid_spec=grid_spec,
        compiler_params=pltpu.CompilerParams(
            dimension_semantics=("parallel",),
            vmem_limit_bytes=vmem_limit),
    )(lab_row, lab_col, feat_p)

    sums = jnp.sum(partials, axis=0)           # (128,), lanes 0..2 are the sums
    inv_n = 1.0 / N
    loss = sums[0] * inv_n                     # == loss.view(views, bsz).mean()
    pos_sim = sums[1] * inv_n
    neg_sim = sums[2] * inv_n
    return loss, pos_sim, neg_sim


def supcon_loss_v2_ref(features, labels=None, *, temperature=0.07,
                       base_temperature=0.07):
    """Pure-JAX f32 reference mirroring the PyTorch forward (default args)."""
    bsz, n_views, dim = features.shape
    N = bsz * n_views
    contrast = jnp.transpose(features, (1, 0, 2)).reshape(N, dim).astype(jnp.float32)
    if labels is None:
        base_mask = jnp.eye(bsz, dtype=jnp.float32)
    else:
        lab = labels.reshape(-1, 1)
        base_mask = (lab == lab.T).astype(jnp.float32)
    adc = (contrast @ contrast.T) / temperature
    logits = adc - jnp.max(adc, axis=1, keepdims=True)
    mask = jnp.tile(base_mask, (n_views, n_views))
    logits_mask = 1.0 - jnp.eye(N, dtype=jnp.float32)
    mask = mask * logits_mask
    exp_logits = jnp.exp(logits) * logits_mask
    log_prob = logits - jnp.log(exp_logits.sum(1, keepdims=True))
    pos = (mask == 1.0).astype(jnp.float32)
    neg = (mask == 0.0).astype(jnp.float32)
    mlpp = (pos * log_prob).sum(1) / (pos.sum(1) + 1.0)
    pos_sim = (pos * jnp.exp(logits)).sum(1) / (pos.sum(1) + 1.0)
    neg_sim = (neg * jnp.exp(logits)).sum(1) / (neg.sum(1) + 1.0)
    loss = (-(temperature / base_temperature) * mlpp).reshape(n_views, bsz).mean()
    return loss, pos_sim.mean(), neg_sim.mean()


if __name__ == "__main__":
    key = jax.random.PRNGKey(0)
    k1, k2, k3 = jax.random.split(key, 3)

    # --- small case ---------------------------------------------------------
    bsz, n_views, dim = 4, 2, 32
    raw = jax.random.normal(k1, (bsz, n_views, dim), dtype=jnp.float32)
    # feature_sim='cosine': callers pass L2-normalized embeddings (unnormalized
    # gaussians at T=0.07 underflow every off-diagonal exp() and NaN out in the
    # torch module too), so the test normalizes its inputs.
    features = raw / jnp.linalg.norm(raw, axis=-1, keepdims=True)
    labels = jnp.array([1.0, 2.0, 1.0, 3.0], dtype=jnp.float32)

    loss, pos_sim, neg_sim = supcon_loss_v2(features, labels)
    jax.block_until_ready(loss)
    ref_loss, ref_pos, ref_neg = supcon_loss_v2_ref(features, labels)
    # bf16 MXU operands at 1/T=14.3 logit scale -> relaxed tolerances vs f32 ref
    assert jnp.allclose(loss, ref_loss, rtol=3e-2, atol=1e-3), (loss, ref_loss)
    assert jnp.allclose(pos_sim, ref_pos, rtol=5e-2, atol=1e-6), (pos_sim, ref_pos)
    assert jnp.allclose(neg_sim, ref_neg, rtol=5e-2, atol=1e-6), (neg_sim, ref_neg)

    # --- multi-tile case (exercises row tiling + padding) -------------------
    bsz2, n_views2, dim2 = 80, 2, 48           # N = 160 > TM = 128 -> 2 tiles, padded
    raw2 = jax.random.normal(k2, (bsz2, n_views2, dim2), dtype=jnp.float32)
    feats2 = raw2 / jnp.linalg.norm(raw2, axis=-1, keepdims=True)
    labels2 = jax.random.randint(k3, (bsz2,), 0, 10).astype(jnp.float32)

    loss2, pos2, neg2 = supcon_loss_v2(feats2, labels2)
    jax.block_until_ready(loss2)
    r_loss2, r_pos2, r_neg2 = supcon_loss_v2_ref(feats2, labels2)
    assert jnp.allclose(loss2, r_loss2, rtol=3e-2, atol=1e-3), (loss2, r_loss2)
    assert jnp.allclose(pos2, r_pos2, rtol=5e-2, atol=1e-6), (pos2, r_pos2)
    assert jnp.allclose(neg2, r_neg2, rtol=5e-2, atol=1e-6), (neg2, r_neg2)

    print("KERNEL_OK")
</pallas_src>

<mosaic_0001>
module attributes {stable_mosaic.version = 11 : i64} {
  func.func @_supcon_kernel(%arg0: i32, %arg1: memref<8x1xf32, #tpu.memory_space<vmem>>, %arg2: memref<1x8xf32, #tpu.memory_space<vmem>>, %arg3: memref<8x128xbf16, #tpu.memory_space<vmem>>, %arg4: memref<8x128xf32, #tpu.memory_space<vmem>>) attributes {dimension_semantics = [#tpu.dimension_semantics<parallel>], iteration_bounds = array<i64: 1>, scalar_prefetch = 0 : i64, scratch_operands = 0 : i64, tpu.core_type = #tpu.core_type<tc>, window_params = [{transform_indices = @transform_0, window_bounds = array<i64: 8, 1>}, {pipeline_mode = #tpu.pipeline_mode<synchronous>, transform_indices = @transform_1, window_bounds = array<i64: 1, 8>}, {pipeline_mode = #tpu.pipeline_mode<synchronous>, transform_indices = @transform_2, window_bounds = array<i64: 8, 128>}, {transform_indices = @transform_3, window_bounds = array<i64: 8, 128>}]} {
    %c8_i32 = arith.constant 8 : i32
    %0 = arith.muli %arg0, %c8_i32 : i32
    %1 = tpu.assume_multiple %0, 8 : i32
    %c0 = arith.constant 0 : index
    %c0_0 = arith.constant 0 : index
    %2 = vector.load %arg3[%c0, %c0_0] : memref<8x128xbf16, #tpu.memory_space<vmem>>, vector<8x128xbf16>
    %3 = arith.index_cast %1 : i32 to index
    %c0_1 = arith.constant 0 : index
    %4 = vector.load %arg3[%3, %c0_1] : memref<8x128xbf16, #tpu.memory_space<vmem>>, vector<8x128xbf16>
    %cst = arith.constant dense<0.000000e+00> : vector<8x8xf32>
    %5 = tpu.matmul %4, %2, %cst {dimension_numbers = #tpu.dot_dimension_numbers<[1], [1], [0], [0], [0, 0, 1, 0], [], []>} : vector<8x128xbf16>, vector<8x128xbf16>, vector<8x8xf32> -> vector<8x8xf32>
    %6 = tpu.iota {dimensions = array<i32: 0>} : vector<8x1xi32>
    %7 = vector.broadcast %1 : i32 to vector<8x1xi32>
    %8 = arith.addi %6, %7 : vector<8x1xi32>
    %9 = tpu.iota {dimensions = array<i32: 1>} : vector<1x8xi32>
    %c8_i32_2 = arith.constant 8 : i32
    %10 = vector.broadcast %c8_i32_2 : i32 to vector<1x8xi32>
    %11 = arith.cmpi slt, %9, %10 : vector<1x8xi32>
    %12 = vector.broadcast %8 : vector<8x1xi32> to vector<8x8xi32>
    %13 = vector.broadcast %9 : vector<1x8xi32> to vector<8x8xi32>
    %14 = arith.cmpi ne, %12, %13 : vector<8x8xi32>
    %cst_3 = arith.constant -1.000000e+30 : f32
    %15 = vector.shape_cast %11 : vector<1x8xi1> to vector<1x8xi1>
    %16 = vector.broadcast %15 : vector<1x8xi1> to vector<8x8xi1>
    %17 = vector.broadcast %cst_3 : f32 to vector<8x8xf32>
    %18 = arith.select %16, %5, %17 : vector<8x8xi1>, vector<8x8xf32>
    %cst_4 = arith.constant dense<0xFF800000> : vector<8xf32>
    %19 = vector.multi_reduction <maximumf>, %18, %cst_4 [1] : vector<8x8xf32> to vector<8xf32>
    %20 = vector.shape_cast %19 : vector<8xf32> to vector<8x1xf32>
    %21 = vector.broadcast %20 : vector<8x1xf32> to vector<8x8xf32>
    %22 = arith.subf %18, %21 : vector<8x8xf32>
    %23 = math.exp %22 : vector<8x8xf32>
    %24 = arith.extui %14 : vector<8x8xi1> to vector<8x8xi32>
    %25 = arith.sitofp %24 : vector<8x8xi32> to vector<8x8xf32>
    %cst_5 = arith.constant dense<0.000000e+00> : vector<8xf32>
    %26 = vector.multi_reduction <add>, %23, %cst_5 [1] : vector<8x8xf32> to vector<8xf32>
    %27 = vector.shape_cast %26 : vector<8xf32> to vector<8x1xf32>
    %28 = arith.mulf %23, %25 : vector<8x8xf32>
    %cst_6 = arith.constant dense<0.000000e+00> : vector<8xf32>
    %29 = vector.multi_reduction <add>, %28, %cst_6 [1] : vector<8x8xf32> to vector<8xf32>
    %30 = vector.shape_cast %29 : vector<8xf32> to vector<8x1xf32>
    %31 = math.log %30 : vector<8x1xf32>
    %c0_7 = arith.constant 0 : index
    %c0_8 = arith.constant 0 : index
    %32 = vector.load %arg1[%c0_7, %c0_8] : memref<8x1xf32, #tpu.memory_space<vmem>>, vector<8x1xf32>
    %c0_9 = arith.constant 0 : index
    %c0_10 = arith.constant 0 : index
    %33 = vector.load %arg2[%c0_9, %c0_10] : memref<1x8xf32, #tpu.memory_space<vmem>>, vector<1x8xf32>
    %34 = vector.broadcast %32 : vector<8x1xf32> to vector<8x8xf32>
    %35 = vector.broadcast %33 : vector<1x8xf32> to vector<8x8xf32>
    %36 = arith.cmpf oeq, %34, %35 : vector<8x8xf32>
    %37 = arith.andi %36, %14 : vector<8x8xi1>
    %38 = arith.extui %37 : vector<8x8xi1> to vector<8x8xi32>
    %39 = arith.sitofp %38 : vector<8x8xi32> to vector<8x8xf32>
    %cst_11 = arith.constant dense<0.000000e+00> : vector<8xf32>
    %40 = vector.multi_reduction <add>, %39, %cst_11 [1] : vector<8x8xf32> to vector<8xf32>
    %41 = vector.shape_cast %40 : vector<8xf32> to vector<8x1xf32>
    %42 = arith.mulf %39, %23 : vector<8x8xf32>
    %cst_12 = arith.constant dense<0.000000e+00> : vector<8xf32>
    %43 = vector.multi_reduction <add>, %42, %cst_12 [1] : vector<8x8xf32> to vector<8xf32>
    %44 = vector.shape_cast %43 : vector<8xf32> to vector<8x1xf32>
    %45 = arith.mulf %39, %22 : vector<8x8xf32>
    %cst_13 = arith.constant dense<0.000000e+00> : vector<8xf32>
    %46 = vector.multi_reduction <add>, %45, %cst_13 [1] : vector<8x8xf32> to vector<8xf32>
    %47 = vector.shape_cast %46 : vector<8xf32> to vector<8x1xf32>
    %cst_14 = arith.constant 1.000000e+00 : f32
    %48 = vector.broadcast %cst_14 : f32 to vector<8x1xf32>
    %49 = arith.addf %41, %48 : vector<8x1xf32>
    %cst_15 = arith.constant 1.000000e+00 : f32
    %50 = vector.broadcast %cst_15 : f32 to vector<8x1xf32>
    %51 = arith.divf %50, %49 : vector<8x1xf32>
    %52 = arith.mulf %41, %31 : vector<8x1xf32>
    %53 = arith.subf %47, %52 : vector<8x1xf32>
    %54 = arith.mulf %53, %51 : vector<8x1xf32>
    %55 = arith.mulf %44, %51 : vector<8x1xf32>
    %56 = arith.subf %27, %44 : vector<8x1xf32>
    %cst_16 = arith.constant 8.000000e+00 : f32
    %57 = vector.broadcast %cst_16 : f32 to vector<8x1xf32>
    %58 = arith.subf %57, %41 : vector<8x1xf32>
    %cst_17 = arith.constant 1.000000e+00 : f32
    %59 = vector.broadcast %cst_17 : f32 to vector<8x1xf32>
    %60 = arith.addf %58, %59 : vector<8x1xf32>
    %61 = arith.divf %56, %60 : vector<8x1xf32>
    %cst_18 = arith.constant -1.000000e+00 : f32
    %62 = vector.broadcast %cst_18 : f32 to vector<8x1xf32>
    %63 = arith.mulf %62, %54 : vector<8x1xf32>
    %c8_i32_19 = arith.constant 8 : i32
    %64 = vector.broadcast %c8_i32_19 : i32 to vector<8x1xi32>
    %65 = arith.cmpi slt, %8, %64 : vector<8x1xi32>
    %66 = arith.extui %65 : vector<8x1xi1> to vector<8x1xi32>
    %67 = arith.sitofp %66 : vector<8x1xi32> to vector<8x1xf32>
    %68 = arith.mulf %63, %67 : vector<8x1xf32>
    %69 = vector.shape_cast %68 : vector<8x1xf32> to vector<1x8x1xf32>
    %cst_20 = arith.constant dense<0.000000e+00> : vector<1xf32>
    %70 = vector.multi_reduction <add>, %69, %cst_20 [1, 2] : vector<1x8x1xf32> to vector<1xf32>
    %71 = vector.shape_cast %70 : vector<1xf32> to vector<1x1x1xf32>
    %72 = vector.extract %71[0, 0, 0] : f32 from vector<1x1x1xf32>
    %73 = vector.broadcast %72 : f32 to vector<1x1xf32>
    %74 = arith.mulf %55, %67 : vector<8x1xf32>
    %75 = vector.shape_cast %74 : vector<8x1xf32> to vector<1x8x1xf32>
    %cst_21 = arith.constant dense<0.000000e+00> : vector<1xf32>
    %76 = vector.multi_reduction <add>, %75, %cst_21 [1, 2] : vector<1x8x1xf32> to vector<1xf32>
    %77 = vector.shape_cast %76 : vector<1xf32> to vector<1x1x1xf32>
    %78 = vector.extract %77[0, 0, 0] : f32 from vector<1x1x1xf32>
    %79 = vector.broadcast %78 : f32 to vector<1x1xf32>
    %80 = arith.mulf %61, %67 : vector<8x1xf32>
    %81 = vector.shape_cast %80 : vector<8x1xf32> to vector<1x8x1xf32>
    %cst_22 = arith.constant dense<0.000000e+00> : vector<1xf32>
    %82 = vector.multi_reduction <add>, %81, %cst_22 [1, 2] : vector<1x8x1xf32> to vector<1xf32>
    %83 = vector.shape_cast %82 : vector<1xf32> to vector<1x1x1xf32>
    %84 = vector.extract %83[0, 0, 0] : f32 from vector<1x1x1xf32>
    %85 = vector.broadcast %84 : f32 to vector<1x1xf32>
    %86 = tpu.iota {dimensions = array<i32: 1>} : vector<8x128xi32>
    %87 = tpu.iota {dimensions = array<i32: 0>} : vector<8x128xi32>
    %c0_i32 = arith.constant 0 : i32
    %88 = vector.broadcast %c0_i32 : i32 to vector<8x128xi32>
    %89 = arith.cmpi eq, %86, %88 : vector<8x128xi32>
    %cst_23 = arith.constant 0.000000e+00 : f32
    %90 = vector.shape_cast %73 : vector<1x1xf32> to vector<1x1xf32>
    %91 = vector.broadcast %90 : vector<1x1xf32> to vector<8x128xf32>
    %92 = vector.broadcast %cst_23 : f32 to vector<8x128xf32>
    %93 = arith.select %89, %91, %92 : vector<8x128xi1>, vector<8x128xf32>
    %c1_i32 = arith.constant 1 : i32
    %94 = vector.broadcast %c1_i32 : i32 to vector<8x128xi32>
    %95 = arith.cmpi eq, %86, %94 : vector<8x128xi32>
    %cst_24 = arith.constant 0.000000e+00 : f32
    %96 = vector.shape_cast %79 : vector<1x1xf32> to vector<1x1xf32>
    %97 = vector.broadcast %96 : vector<1x1xf32> to vector<8x128xf32>
    %98 = vector.broadcast %cst_24 : f32 to vector<8x128xf32>
    %99 = arith.select %95, %97, %98 : vector<8x128xi1>, vector<8x128xf32>
    %100 = arith.addf %93, %99 : vector<8x128xf32>
    %c2_i32 = arith.constant 2 : i32
    %101 = vector.broadcast %c2_i32 : i32 to vector<8x128xi32>
    %102 = arith.cmpi eq, %86, %101 : vector<8x128xi32>
    %cst_25 = arith.constant 0.000000e+00 : f32
    %103 = vector.shape_cast %85 : vector<1x1xf32> to vector<1x1xf32>
    %104 = vector.broadcast %103 : vector<1x1xf32> to vector<8x128xf32>
    %105 = vector.broadcast %cst_25 : f32 to vector<8x128xf32>
    %106 = arith.select %102, %104, %105 : vector<8x128xi1>, vector<8x128xf32>
    %107 = arith.addf %100, %106 : vector<8x128xf32>
    %c0_i32_26 = arith.constant 0 : i32
    %108 = vector.broadcast %c0_i32_26 : i32 to vector<8x128xi32>
    %109 = arith.cmpi eq, %87, %108 : vector<8x128xi32>
    %cst_27 = arith.constant 0.000000e+00 : f32
    %110 = vector.broadcast %cst_27 : f32 to vector<8x128xf32>
    %111 = arith.select %109, %107, %110 : vector<8x128xi1>, vector<8x128xf32>
    %c0_28 = arith.constant 0 : index
    %c0_29 = arith.constant 0 : index
    %112 = vector.load %arg4[%c0_28, %c0_29] : memref<8x128xf32, #tpu.memory_space<vmem>>, vector<8x128xf32>
    tpu.vector_store %arg4[%c0_28, %c0_29], %111 {strides = array<i32>} : memref<8x128xf32, #tpu.memory_space<vmem>>, vector<8x128xf32>,
    return
  }
  func.func @transform_0(%arg0: i32) -> (i32, i32) {
    %c0_i32 = arith.constant 0 : i32
    %c0_i32_0 = arith.constant 0 : i32
    return %arg0, %c0_i32 : i32, i32
  }
  func.func @transform_1(%arg0: i32) -> (i32, i32) {
    %c0_i32 = arith.constant 0 : i32
    %c0_i32_0 = arith.constant 0 : i32
    %c0_i32_1 = arith.constant 0 : i32
    return %c0_i32, %c0_i32_0 : i32, i32
  }
  func.func @transform_2(%arg0: i32) -> (i32, i32) {
    %c0_i32 = arith.constant 0 : i32
    %c0_i32_0 = arith.constant 0 : i32
    %c0_i32_1 = arith.constant 0 : i32
    return %c0_i32, %c0_i32_0 : i32, i32
  }
  func.func @transform_3(%arg0: i32) -> (i32, i32) {
    %c0_i32 = arith.constant 0 : i32
    %c0_i32_0 = arith.constant 0 : i32
    return %arg0, %c0_i32 : i32, i32
  }
}

</mosaic_0001>

<llo_original>
// kernel: tpu_custom_call.1
$region0: #{tpu_custom_call.1}
  #allocation0 [shape = 'u32[]', space=smem, size = 0x4, offset = 0x4, fixed_abs, tag = 'smem constant byte address 0x4 - core index']
  #allocation1 [shape = 'u32[144,128]{1,0:T(1,128)}', space=vmem, size = 0x12000, scoped, tag = 'internal scratch']
  %s0 = inlined_call_operand.vmem [shape: f32[8,1], index: 0, kind: input, shape index: {}]
  %s1 = inlined_call_operand.vmem [shape: f32[1,8], index: 1, kind: input, shape index: {}]
  %s2 = inlined_call_operand.vmem [shape: bf16[8,128], index: 2, kind: input, shape index: {}]
  %s3 = inlined_call_operand.hbm [shape: f32[8,128], index: 3, kind: output, shape index: {}]
  %s4 = sld [smem:[#allocation0]]
  $region22: #{tpu_custom_call.1} parent=0
    _
  %s6 = ssub.s32 1, %s4
  %s7 = scalar_select 0, %s6, %s4
  $region1: #{tpu_custom_call.1} parent=0
    #allocation2 [shape = 'u8[4096]{0}', space=vmem, size = 0x1000, scoped, tag = 'output window, operand 0, single buffered']
    #allocation3 [shape = 's32[1]{0}', space=sflag, size = 0x4, scoped, tag = 'scoped memory for tpu_custom_call.1']
    %8 = vsyncpa [#allocation3], 0
    // Predicated region
    $region2: #{tpu_custom_call.1} parent=1 // pred_check
      _
    $region3: #{tpu_custom_call.1} parent=1 // pred_check_branch
      %10 = sbr.rel (0) target = $region5
    $region4: #{tpu_custom_call.1} parent=1 // pred_region
      _
    $region5: #{tpu_custom_call.1} parent=1 // pred_fallthru
      _
    // Predicated region
    $region6: #{tpu_custom_call.1} parent=1 // pred_check
      _
    $region7: #{tpu_custom_call.1} parent=1 // pred_check_branch
      %12 = sbr.rel (0) target = $region9
    $region8: #{tpu_custom_call.1} parent=1 // pred_region
      _
    $region9: #{tpu_custom_call.1} parent=1 // pred_fallthru
      _
    // Predicated region
    $region10: #{tpu_custom_call.1} parent=1 // pred_check
      _
    $region11: #{tpu_custom_call.1} parent=1 // pred_check_branch
      %14 = sbr.rel (0) target = $region13
    $region12: #{tpu_custom_call.1} parent=1 // pred_region
      _
    $region13: #{tpu_custom_call.1} parent=1 // pred_fallthru
      _
    %s16 = smul.u32 0, 8
    %v17 = vld [vmem:[%s2] sm:$0xf]
    %s18 = sshra.s32 %s16, 3
    %s19 = sand.u32 %s16, 7
    %s20 = smul.addr %s18, 4
    %s21 = scalar_lea.vmem %s2, %s20
    %v22 = vld [vmem:[%s21] sm:$0xf]
    %23 = vmatprep.subr.bf16.mxu0 0
    %24 = vmatpush1.bf16.xpose.msra.mxu0 %v17
    %25 = vmatprep.subr.bf16.mxu0 0
    %26 = vmatpush1.bf16.xpose.msra.mxu0 0
    %27 = vmatprep.subr.bf16.mxu0 0
    %28 = vmatpush1.bf16.xpose.msra.mxu0 0
    %29 = vmatprep.subr.bf16.mxu0 0
    %30 = vmatpush1.bf16.xpose.msra.mxu0 0
    %31 = vmatprep.subr.bf16.mxu0 0
    %32 = vmatpush1.bf16.xpose.msra.mxu0 0
    %33 = vmatprep.subr.bf16.mxu0 0
    %34 = vmatpush1.bf16.xpose.msra.mxu0 0
    %35 = vmatprep.subr.bf16.mxu0 0
    %36 = vmatpush1.bf16.xpose.msra.mxu0 0
    %37 = vmatprep.subr.bf16.mxu0 0
    %38 = vmatpush1.bf16.xpose.msra.mxu0 0
    %39 = vmatprep.subr.bf16.mxu0 0
    %40 = vmatpush1.bf16.xpose.msra.mxu0 0
    %41 = vmatprep.subr.bf16.mxu0 0
    %42 = vmatpush1.bf16.xpose.msra.mxu0 0
    %43 = vmatprep.subr.bf16.mxu0 0
    %44 = vmatpush1.bf16.xpose.msra.mxu0 0
    %45 = vmatprep.subr.bf16.mxu0 0
    %46 = vmatpush1.bf16.xpose.msra.mxu0 0
    %47 = vmatprep.subr.bf16.mxu0 0
    %48 = vmatpush1.bf16.xpose.msra.mxu0 0
    %49 = vmatprep.subr.bf16.mxu0 0
    %50 = vmatpush1.bf16.xpose.msra.mxu0 0
    %51 = vmatprep.subr.bf16.mxu0 0
    %52 = vmatpush1.bf16.xpose.msra.mxu0 0
    %53 = vmatprep.subr.bf16.mxu0 0
    %54 = vmatpush1.bf16.xpose.msra.mxu0 0
    %55 = vmatprep.mubr.bf16.mxu0 0
    %56 = vmatmul.mubr.bf16.gmra.mrb[0].mxu0 %v22
    %v57 = vpop.f32.mrb[0].mxu0
    %v58 = vadd.f32 0.0, %v57
    %v59 = vpop.f32.mrb[0].mxu0
    %v60 = vpop.f32.mrb[0].mxu0
    %v61 = vpop.f32.mrb[0].mxu0
    %62 = vdwg.mxu0
    %v63 = vlaneseq
    %v64 = vshrl.u32 %v63, 7
    %v65 = vstv %s16
    %v66 = vadd.s32 %v64, %v65
    %v67 = vlaneseq
    %v68 = vand.u32 %v67, 127
    %vm69 = vcmp.lt.s32.totalorder %v68, 8
    %vm70 = vcmp.ne.s32.totalorder %v66, %v68
    %v71 = vsel %vm69, 1, 0
    %vm72 = vcmp.eq.s32.totalorder %v71, 1
    %v73 = vsel %vm72, %v58, -1e+30
    %vm74 = vcmask 64512
    %v75 = vsel %vm74, %v73, -inf
    %76 = vmax.xlane.f32.xlu0 %v75
    %v77 = vpop.xlane.xlu0 %76
    %v78 = vsub.f32 %v73, %v77
    %v79 = vmul.f32 %v78, 1.442695
    %v80 = vpow.pop %v79
    %v81 = vsel %vm70, 1, 0
    %v82 = vcvt.s32.f32 %v81
    %v83 = vsel %vm74, %v80, 0.0
    %84 = vadd.xlane.f32.xlu0 %v83
    %v85 = vpop.xlane.xlu0 %84
    %v86 = vmul.f32 %v80, %v82
    %v87 = vsel %vm74, %v86, 0.0
    %88 = vadd.xlane.f32.xlu0 %v87
    %v89 = vpop.xlane.xlu0 %88
    %v90 = vlog2.pop %v89
    %v91 = vmul.f32 %v90, 0.6931472
    %v92 = vld [vmem:[%s0] sm:$0xff]
    %v93 = vld [vmem:[%s1] sm:$0x1]
    %95 = vset.pattern.permute.xlu0 0
    %96 = vperm.xlu0 %95, %v92
    %v97 = vpop.permute.xlu0 %96
    %v100 = vlaneseq
    %v101 = vshrl.u32 %v100, 7
    %v102 = vsub.s32 0, %v101
    %v103 = vrot.slane %v93, %v102
    %vm105 = vcmp.eq.f32.partialorder %v97, %v103
    %vm106 = vmand %vm105, %vm70
    %v107 = vsel %vm106, 1, 0
    %v108 = vcvt.s32.f32 %v107
    %v109 = vsel %vm74, %v108, 0.0
    %110 = vadd.xlane.f32.xlu0 %v109
    %v111 = vpop.xlane.xlu0 %110
    %v112 = vmul.f32 %v108, %v80
    %v113 = vsel %vm74, %v112, 0.0
    %114 = vadd.xlane.f32.xlu0 %v113
    %v115 = vpop.xlane.xlu0 %114
    %v116 = vmul.f32 %v108, %v78
    %v117 = vsel %vm74, %v116, 0.0
    %118 = vadd.xlane.f32.xlu0 %v117
    %v119 = vpop.xlane.xlu0 %118
    %v120 = vadd.f32 %v111, 1.0
    %v121 = vrcp.pop %v120
    %v122 = vmul.f32 1.0, %v121
    %v123 = vmul.f32 %v111, %v91
    %v124 = vsub.f32 %v119, %v123
    %v125 = vmul.f32 %v124, %v122
    %v126 = vmul.f32 %v115, %v122
    %v127 = vsub.f32 %v85, %v115
    %v128 = vsub.f32 8.0, %v111
    %v129 = vadd.f32 %v128, 1.0
    %v130 = vrcp.pop %v129
    %v131 = vmul.f32 %v127, %v130
    %v132 = vmul.f32 %v125, -1.0
    %vm133 = vcmp.lt.s32.totalorder %v66, 8
    %v134 = vsel %vm133, 1, 0
    %v135 = vcvt.s32.f32 %v134
    %v136 = vmul.f32 %v132, %v135
    %vm137 = vcmask 7168
    %v138 = vsel %vm137, %v136, 0.0
    %139 = vadd.xlane.f32.xlu0 %v138
    %v140 = vpop.xlane.xlu0 %139
    %v141 = vrot.slane %v140, 4
    %v142 = vadd.f32 %v140, %v141
    %v143 = vrot.slane %v142, 2
    %v144 = vadd.f32 %v142, %v143
    %v145 = vrot.slane %v144, 1
    %v146 = vadd.f32 %v144, %v145
    %s147 = vtos %v146
    %v148 = vmul.f32 %v126, %v135
    %v149 = vsel %vm137, %v148, 0.0
    %150 = vadd.xlane.f32.xlu0 %v149
    %v151 = vpop.xlane.xlu0 %150
    %v152 = vrot.slane %v151, 4
    %v153 = vadd.f32 %v151, %v152
    %v154 = vrot.slane %v153, 2
    %v155 = vadd.f32 %v153, %v154
    %v156 = vrot.slane %v155, 1
    %v157 = vadd.f32 %v155, %v156
    %s158 = vtos %v157
    %v159 = vmul.f32 %v131, %v135
    %v160 = vsel %vm137, %v159, 0.0
    %161 = vadd.xlane.f32.xlu0 %v160
    %v162 = vpop.xlane.xlu0 %161
    %v163 = vrot.slane %v162, 4
    %v164 = vadd.f32 %v162, %v163
    %v165 = vrot.slane %v164, 2
    %v166 = vadd.f32 %v164, %v165
    %v167 = vrot.slane %v166, 1
    %v168 = vadd.f32 %v166, %v167
    %s169 = vtos %v168
    %vm170 = vcmp.eq.s32.totalorder %v68, 0
    %v171 = vstv %s147
    %v172 = vsel %vm170, %v171, 0.0
    %vm173 = vcmp.eq.s32.totalorder %v68, 1
    %v174 = vstv %s158
    %v175 = vsel %vm173, %v174, 0.0
    %v176 = vadd.f32 %v172, %v175
    %vm177 = vcmp.eq.s32.totalorder %v68, 2
    %v178 = vstv %s169
    %v179 = vsel %vm177, %v178, 0.0
    %v180 = vadd.f32 %v176, %v179
    %vm181 = vcmp.eq.s32.totalorder %v64, 0
    %v182 = vsel %vm181, %v180, 0.0
    %183 = vst [vmem:[#allocation2] sm:$0xff] %v182
    // Predicated region
    $region14: #{tpu_custom_call.1} parent=1 // pred_check
      _
    $region15: #{tpu_custom_call.1} parent=1 // pred_check_branch
      %185 = sbr.rel (0) target = $region17
    $region16: #{tpu_custom_call.1} parent=1 // pred_region
      %s187 = ssub.s32 128, 128
      %188 = vsyncadd [#allocation3], %s187
      %s190 = sshll.u32 [#allocation2], 4
      %s191 = int_to_ptr.vmem [resolvable:$true] %s190
      %193 = dma.vmem_to_hbm [thread:$0]  %s191, 128, %s3, [#allocation3]
    $region17: #{tpu_custom_call.1} parent=1 // pred_fallthru
      _
    // Predicated region
    $region18: #{tpu_custom_call.1} parent=1 // pred_check
      _
    $region19: #{tpu_custom_call.1} parent=1 // pred_check_branch
      %195 = sbr.rel (0) target = $region21
    $region20: #{tpu_custom_call.1} parent=1 // pred_region
      %196 = dma.done [#allocation3], 128
    $region21: #{tpu_custom_call.1} parent=1 // pred_fallthru
      _
    %197 = vsyncpa [#allocation3], 1

</llo_original>
